<compile_context>
chip_gen: v5e
topology: v5e:2x2
jax: 0.10.0
libtpu: 0.0.40
codegen_flags: <defaults>
</compile_context>

<pallas_src>
import functools

import jax
import jax.numpy as jnp
from jax.experimental import pallas as pl
from jax.experimental.pallas import tpu as pltpu


def _round_up(x, m):
    return ((x + m - 1) // m) * m


def _simclr_loss_kernel(z1_ref, z2_ref, tgt_ref, out_ref, acc_ref, *,
                        batch_size, tiles_per_core):
    c = pl.program_id(0)   # core-slice axis ("parallel"; sharded across TCs on v7x)
    i = pl.program_id(1)   # batch-tile axis within the slice ("arbitrary"/serial)

    @pl.when(i == 0)
    def _():
        acc_ref[...] = jnp.zeros_like(acc_ref)

    z1 = z1_ref[...].astype(jnp.float32) + 1e-8
    z2 = z2_ref[...].astype(jnp.float32) + 1e-8

    # Fused F.normalize(dim=1) + F.cosine_similarity(dim=1):
    #   sim = <z1, z2> / (max(||z1||, 1e-12) * max(||z2||, 1e-12))
    # (the cosine_similarity eps on already-unit vectors is a no-op).
    # Only 3 lane-axis reductions, rsqrt on the EUP, no (TB, D) divides.
    s11 = jnp.sum(z1 * z1, axis=1, keepdims=True)                 # (TB, 1)
    s22 = jnp.sum(z2 * z2, axis=1, keepdims=True)
    s12 = jnp.sum(z1 * z2, axis=1, keepdims=True)
    inv1 = jax.lax.rsqrt(jnp.maximum(s11, 1e-24))  # == 1 / max(||z1||, 1e-12)
    inv2 = jax.lax.rsqrt(jnp.maximum(s22, 1e-24))
    sim = s12 * inv1 * inv2                                       # (TB, 1)

    # probs = clamp((sim + 1) / 2, 1e-6, 1 - 1e-6)
    probs = jnp.clip((sim + 1.0) * 0.5, 1e-6, 1.0 - 1e-6)

    # binary_cross_entropy(probs, targets) per example
    t = tgt_ref[...].astype(jnp.float32)                          # (TB, 1)
    per_ex = -(t * jnp.log(probs) + (1.0 - t) * jnp.log(1.0 - probs))

    # Mask rows that fall outside the real batch (partial last tile, or a
    # fully-out-of-range tile of the last core slice whose index_map was
    # clamped).  Select-before-accumulate: garbage rows may hold NaN/Inf but
    # jnp.where drops them before they touch the accumulator.
    tb = per_ex.shape[0]
    blk = c * tiles_per_core + i
    row = blk * tb + jax.lax.broadcasted_iota(jnp.int32, per_ex.shape, 0)
    per_ex = jnp.where(row < batch_size, per_ex, 0.0)

    acc_ref[...] += jnp.sum(per_ex, axis=0, keepdims=True)        # (1, 1)

    @pl.when(i == pl.num_programs(1) - 1)
    def _():
        # Per-core partial sum, broadcast into this core's lane-dense output
        # block.  The 1/B scale and cross-core sum happen in the wrapper.
        out_ref[...] = jnp.broadcast_to(acc_ref[...], out_ref.shape)


def simclr_loss(z1, z2, labels, *, block_b=None, num_core_slices=2):
    """z1, z2: (B, D) float (f32 or bf16); labels: (B, C). Returns scalar f32."""
    B, D = z1.shape
    itemsize = z1.dtype.itemsize

    # torch.argmax(labels, dim=1) hoisted out of the kernel (cheap in XLA).
    targets = jnp.argmax(labels, axis=1).astype(jnp.float32).reshape(B, 1)

    # --- generation-aware VMEM budget -------------------------------------
    try:
        vmem_cap = int(pltpu.get_tpu_info().vmem_capacity_bytes)
    except Exception:  # conservative fallback (covers v7x's 64 MiB/TC)
        vmem_cap = 64 << 20
    # Working-set budget for the double-buffered streams: ~60% of physical
    # VMEM, capped at 64 MiB (v7x -> ~38 MiB, v5e/v6e -> 64 MiB).
    budget = min((vmem_cap * 3) // 5, 64 << 20)

    # Bytes of VMEM consumed per batch row:
    #   z1 + z2 blocks: 2 inputs x 2 pipeline buffers x D x itemsize
    #   targets block : (TB,1) f32 lane-padded to (TB,128), 2 buffers
    per_row_bytes = 2 * 2 * D * itemsize + 2 * 128 * 4

    if block_b is None:
        block_b = max(8, budget // per_row_bytes)
    TB = max(8, min(block_b, _round_up(B, 8)))
    TB = max(8, (TB // 8) * 8)          # sublane-aligned tile

    n_blocks = pl.cdiv(B, TB)
    # Leading "parallel" axis: sharded across the 2 TensorCores on v7x; plain
    # serial split (harmless) on single-TC v5e/v6e.
    NC = max(1, min(num_core_slices, n_blocks))
    tiles_per_core = pl.cdiv(n_blocks, NC)

    def in_map(c, i):
        # Clamp so a fully-out-of-range tile of the last core slice re-reads
        # the last valid block instead of issuing an OOB DMA; the kernel masks
        # those rows with the *unclamped* global row index.
        return (jnp.minimum(c * tiles_per_core + i, n_blocks - 1), 0)

    kernel = functools.partial(
        _simclr_loss_kernel, batch_size=B, tiles_per_core=tiles_per_core)

    vmem_limit = int(min(vmem_cap, budget + (16 << 20)))

    cost = pl.CostEstimate(
        flops=6 * B * D,
        transcendentals=4 * B,
        bytes_accessed=2 * B * D * itemsize + 4 * B + NC * 8 * 128 * 4,
    )

    partials = pl.pallas_call(
        kernel,
        # One lane-dense (8,128) block per core slice (keeps block shapes on
        # the (8,128) grain); only element [c, 0, 0] is meaningful.
        out_shape=jax.ShapeDtypeStruct((NC, 8, 128), jnp.float32),
        grid=(NC, tiles_per_core),
        in_specs=[
            pl.BlockSpec((TB, D), in_map),
            pl.BlockSpec((TB, D), in_map),
            pl.BlockSpec((TB, 1), in_map),
        ],
        out_specs=pl.BlockSpec((1, 8, 128), lambda c, i: (c, 0, 0)),
        scratch_shapes=[pltpu.VMEM((1, 1), jnp.float32)],
        compiler_params=pltpu.CompilerParams(
            dimension_semantics=("parallel", "arbitrary"),
            vmem_limit_bytes=vmem_limit,
        ),
        cost_estimate=cost,
    )(z1, z2, targets)

    # reduction='mean' over the B similarities.
    return jnp.sum(partials[:, 0, 0]) * (1.0 / B)
    # TODO(synk): for very large D (TB collapsing below ~64 rows) add a second
    # "arbitrary" grid axis over D carrying s11/s22/s12 partials in scratch.


def _ref_loss(z1, z2, labels):
    """Pure-JAX reference of the PyTorch forward."""
    a = z1.astype(jnp.float32) + 1e-8
    b = z2.astype(jnp.float32) + 1e-8
    a = a / jnp.maximum(jnp.linalg.norm(a, axis=1, keepdims=True), 1e-12)
    b = b / jnp.maximum(jnp.linalg.norm(b, axis=1, keepdims=True), 1e-12)
    dot = jnp.sum(a * b, axis=1)
    na = jnp.maximum(jnp.linalg.norm(a, axis=1), 1e-8)
    nb = jnp.maximum(jnp.linalg.norm(b, axis=1), 1e-8)
    sim = dot / (na * nb)
    t = jnp.argmax(labels, axis=1).astype(jnp.float32)
    p = jnp.clip((sim + 1.0) / 2.0, 1e-6, 1.0 - 1e-6)
    return jnp.mean(-(t * jnp.log(p) + (1.0 - t) * jnp.log(1.0 - p)))


if __name__ == "__main__":
    key = jax.random.PRNGKey(0)

    # --- test 1: small shapes consistent with (batch, embedding_dim) inputs ---
    B, D, C = 8, 32, 2
    k1, k2, k3, key = jax.random.split(key, 4)
    z1 = jax.random.normal(k1, (B, D), dtype=jnp.float32)
    z2 = jax.random.normal(k2, (B, D), dtype=jnp.float32)
    labels = jax.nn.one_hot(jax.random.randint(k3, (B,), 0, C), C,
                            dtype=jnp.float32)
    loss = simclr_loss(z1, z2, labels)
    jax.block_until_ready(loss)
    assert jnp.allclose(loss, _ref_loss(z1, z2, labels), rtol=1e-5, atol=1e-5)

    # --- test 2: multi-tile, both core slices, partial + fully-masked tiles ---
    B2 = 20
    k1, k2, k3, key = jax.random.split(key, 4)
    z1b = jax.random.normal(k1, (B2, D), dtype=jnp.float32)
    z2b = jax.random.normal(k2, (B2, D), dtype=jnp.float32)
    labels_b = jax.nn.one_hot(jax.random.randint(k3, (B2,), 0, C), C,
                              dtype=jnp.float32)
    loss2 = simclr_loss(z1b, z2b, labels_b, block_b=8)   # grid=(2,2), clamped tail
    jax.block_until_ready(loss2)
    assert jnp.allclose(loss2, _ref_loss(z1b, z2b, labels_b),
                        rtol=1e-5, atol=1e-5)

    # --- test 3: bf16 inputs streamed natively (f32 upcast happens in-kernel) ---
    B3 = 16
    k1, k2, k3, key = jax.random.split(key, 4)
    z1c = jax.random.normal(k1, (B3, D), dtype=jnp.float32).astype(jnp.bfloat16)
    z2c = jax.random.normal(k2, (B3, D), dtype=jnp.float32).astype(jnp.bfloat16)
    labels_c = jax.nn.one_hot(jax.random.randint(k3, (B3,), 0, C), C,
                              dtype=jnp.float32)
    loss3 = simclr_loss(z1c, z2c, labels_c)
    jax.block_until_ready(loss3)
    assert jnp.allclose(loss3, _ref_loss(z1c, z2c, labels_c),
                        rtol=1e-5, atol=1e-5)

    print("KERNEL_OK")
</pallas_src>

<mosaic_0001>
module attributes {stable_mosaic.version = 11 : i64} {
  func.func @_simclr_loss_kernel(%arg0: i32, %arg1: i32, %arg2: memref<8x32xf32, #tpu.memory_space<vmem>>, %arg3: memref<8x32xf32, #tpu.memory_space<vmem>>, %arg4: memref<8x1xf32, #tpu.memory_space<vmem>>, %arg5: memref<1x8x128xf32, #tpu.memory_space<vmem>>, %arg6: memref<1x1xf32, #tpu.memory_space<vmem>>) attributes {dimension_semantics = [#tpu.dimension_semantics<parallel>, #tpu.dimension_semantics<arbitrary>], iteration_bounds = array<i64: 1, 1>, scalar_prefetch = 0 : i64, scratch_operands = 1 : i64, tpu.core_type = #tpu.core_type<tc>, window_params = [{transform_indices = @transform_0, window_bounds = array<i64: 8, 32>}, {transform_indices = @transform_1, window_bounds = array<i64: 8, 32>}, {transform_indices = @transform_2, window_bounds = array<i64: 8, 1>}, {transform_indices = @transform_3, window_bounds = array<i64: 1, 8, 128>}]} {
    %c0_i32 = arith.constant 0 : i32
    %0 = arith.cmpi eq, %arg1, %c0_i32 : i32
    %1 = arith.extui %0 : i1 to i32
    %c0_i32_0 = arith.constant 0 : i32
    %2 = arith.cmpi ne, %1, %c0_i32_0 : i32
    scf.if %2 {
      %cst_28 = arith.constant 0.000000e+00 : f32
      %64 = vector.broadcast %cst_28 : f32 to vector<1x1xf32>
      %c0_29 = arith.constant 0 : index
      %c0_30 = arith.constant 0 : index
      %65 = vector.load %arg6[%c0_29, %c0_30] : memref<1x1xf32, #tpu.memory_space<vmem>>, vector<1x1xf32>
      tpu.vector_store %arg6[%c0_29, %c0_30], %64 {strides = array<i32>} : memref<1x1xf32, #tpu.memory_space<vmem>>, vector<1x1xf32>,
    } else {
    }
    %c0 = arith.constant 0 : index
    %c0_1 = arith.constant 0 : index
    %3 = vector.load %arg2[%c0, %c0_1] : memref<8x32xf32, #tpu.memory_space<vmem>>, vector<8x32xf32>
    %cst = arith.constant 9.99999993E-9 : f32
    %4 = vector.broadcast %cst : f32 to vector<8x32xf32>
    %5 = arith.addf %3, %4 : vector<8x32xf32>
    %c0_2 = arith.constant 0 : index
    %c0_3 = arith.constant 0 : index
    %6 = vector.load %arg3[%c0_2, %c0_3] : memref<8x32xf32, #tpu.memory_space<vmem>>, vector<8x32xf32>
    %cst_4 = arith.constant 9.99999993E-9 : f32
    %7 = vector.broadcast %cst_4 : f32 to vector<8x32xf32>
    %8 = arith.addf %6, %7 : vector<8x32xf32>
    %9 = arith.mulf %5, %5 : vector<8x32xf32>
    %cst_5 = arith.constant dense<0.000000e+00> : vector<8xf32>
    %10 = vector.multi_reduction <add>, %9, %cst_5 [1] : vector<8x32xf32> to vector<8xf32>
    %11 = vector.shape_cast %10 : vector<8xf32> to vector<8x1xf32>
    %12 = arith.mulf %8, %8 : vector<8x32xf32>
    %cst_6 = arith.constant dense<0.000000e+00> : vector<8xf32>
    %13 = vector.multi_reduction <add>, %12, %cst_6 [1] : vector<8x32xf32> to vector<8xf32>
    %14 = vector.shape_cast %13 : vector<8xf32> to vector<8x1xf32>
    %15 = arith.mulf %5, %8 : vector<8x32xf32>
    %cst_7 = arith.constant dense<0.000000e+00> : vector<8xf32>
    %16 = vector.multi_reduction <add>, %15, %cst_7 [1] : vector<8x32xf32> to vector<8xf32>
    %17 = vector.shape_cast %16 : vector<8xf32> to vector<8x1xf32>
    %cst_8 = arith.constant 1.000000e-24 : f32
    %18 = vector.broadcast %cst_8 : f32 to vector<8x1xf32>
    %19 = arith.maximumf %11, %18 : vector<8x1xf32>
    %20 = math.rsqrt %19 : vector<8x1xf32>
    %cst_9 = arith.constant 1.000000e-24 : f32
    %21 = vector.broadcast %cst_9 : f32 to vector<8x1xf32>
    %22 = arith.maximumf %14, %21 : vector<8x1xf32>
    %23 = math.rsqrt %22 : vector<8x1xf32>
    %24 = arith.mulf %17, %20 : vector<8x1xf32>
    %25 = arith.mulf %24, %23 : vector<8x1xf32>
    %cst_10 = arith.constant 1.000000e+00 : f32
    %26 = vector.broadcast %cst_10 : f32 to vector<8x1xf32>
    %27 = arith.addf %25, %26 : vector<8x1xf32>
    %cst_11 = arith.constant 5.000000e-01 : f32
    %28 = vector.broadcast %cst_11 : f32 to vector<8x1xf32>
    %29 = arith.mulf %27, %28 : vector<8x1xf32>
    %cst_12 = arith.constant 9.99999997E-7 : f32
    %cst_13 = arith.constant 0.999998986 : f32
    %30 = vector.broadcast %cst_12 : f32 to vector<8x1xf32>
    %31 = arith.maximumf %30, %29 : vector<8x1xf32>
    %32 = vector.broadcast %cst_13 : f32 to vector<8x1xf32>
    %33 = arith.minimumf %32, %31 : vector<8x1xf32>
    %c0_14 = arith.constant 0 : index
    %c0_15 = arith.constant 0 : index
    %34 = vector.load %arg4[%c0_14, %c0_15] : memref<8x1xf32, #tpu.memory_space<vmem>>, vector<8x1xf32>
    %35 = math.log %33 : vector<8x1xf32>
    %36 = arith.mulf %34, %35 : vector<8x1xf32>
    %cst_16 = arith.constant 1.000000e+00 : f32
    %37 = vector.broadcast %cst_16 : f32 to vector<8x1xf32>
    %38 = arith.subf %37, %34 : vector<8x1xf32>
    %cst_17 = arith.constant 1.000000e+00 : f32
    %39 = vector.broadcast %cst_17 : f32 to vector<8x1xf32>
    %40 = arith.subf %39, %33 : vector<8x1xf32>
    %41 = math.log %40 : vector<8x1xf32>
    %42 = arith.mulf %38, %41 : vector<8x1xf32>
    %43 = arith.addf %36, %42 : vector<8x1xf32>
    %cst_18 = arith.constant 0.000000e+00 : f32
    %44 = vector.broadcast %cst_18 : f32 to vector<8x1xf32>
    %45 = arith.subf %44, %43 : vector<8x1xf32>
    %c1_i32 = arith.constant 1 : i32
    %46 = arith.muli %arg0, %c1_i32 : i32
    %47 = arith.addi %46, %arg1 : i32
    %c8_i32 = arith.constant 8 : i32
    %48 = arith.muli %47, %c8_i32 : i32
    %49 = tpu.iota {dimensions = array<i32: 0>} : vector<8x1xi32>
    %50 = vector.broadcast %48 : i32 to vector<8x1xi32>
    %51 = arith.addi %50, %49 : vector<8x1xi32>
    %c8_i32_19 = arith.constant 8 : i32
    %52 = vector.broadcast %c8_i32_19 : i32 to vector<8x1xi32>
    %53 = arith.cmpi slt, %51, %52 : vector<8x1xi32>
    %cst_20 = arith.constant 0.000000e+00 : f32
    %54 = vector.broadcast %cst_20 : f32 to vector<8x1xf32>
    %55 = arith.select %53, %45, %54 : vector<8x1xi1>, vector<8x1xf32>
    %c0_21 = arith.constant 0 : index
    %c0_22 = arith.constant 0 : index
    %56 = vector.load %arg6[%c0_21, %c0_22] : memref<1x1xf32, #tpu.memory_space<vmem>>, vector<1x1xf32>
    %cst_23 = arith.constant dense<0.000000e+00> : vector<1xf32>
    %57 = vector.multi_reduction <add>, %55, %cst_23 [0] : vector<8x1xf32> to vector<1xf32>
    %58 = vector.shape_cast %57 : vector<1xf32> to vector<1x1xf32>
    %59 = arith.addf %56, %58 : vector<1x1xf32>
    %c0_24 = arith.constant 0 : index
    %c0_25 = arith.constant 0 : index
    %60 = vector.load %arg6[%c0_24, %c0_25] : memref<1x1xf32, #tpu.memory_space<vmem>>, vector<1x1xf32>
    tpu.vector_store %arg6[%c0_24, %c0_25], %59 {strides = array<i32>} : memref<1x1xf32, #tpu.memory_space<vmem>>, vector<1x1xf32>,
    %c0_i32_26 = arith.constant 0 : i32
    %61 = arith.cmpi eq, %arg1, %c0_i32_26 : i32
    %62 = arith.extui %61 : i1 to i32
    %c0_i32_27 = arith.constant 0 : i32
    %63 = arith.cmpi ne, %62, %c0_i32_27 : i32
    scf.if %63 {
      %c0_28 = arith.constant 0 : index
      %c0_29 = arith.constant 0 : index
      %64 = vector.load %arg6[%c0_28, %c0_29] : memref<1x1xf32, #tpu.memory_space<vmem>>, vector<1x1xf32>
      %65 = vector.shape_cast %64 : vector<1x1xf32> to vector<1x1x1xf32>
      %66 = vector.broadcast %65 : vector<1x1x1xf32> to vector<1x8x128xf32>
      %c0_30 = arith.constant 0 : index
      %c0_31 = arith.constant 0 : index
      %c0_32 = arith.constant 0 : index
      %67 = vector.load %arg5[%c0_30, %c0_31, %c0_32] : memref<1x8x128xf32, #tpu.memory_space<vmem>>, vector<1x8x128xf32>
      tpu.vector_store %arg5[%c0_30, %c0_31, %c0_32], %66 {strides = array<i32>} : memref<1x8x128xf32, #tpu.memory_space<vmem>>, vector<1x8x128xf32>,
    } else {
    }
    return
  }
  func.func @transform_0(%arg0: i32, %arg1: i32) -> (i32, i32) {
    %c1_i32 = arith.constant 1 : i32
    %0 = arith.muli %arg0, %c1_i32 : i32
    %1 = arith.addi %0, %arg1 : i32
    %c0_i32 = arith.constant 0 : i32
    %2 = arith.minsi %1, %c0_i32 : i32
    %c0_i32_0 = arith.constant 0 : i32
    %c0_i32_1 = arith.constant 0 : i32
    return %2, %c0_i32_0 : i32, i32
  }
  func.func @transform_1(%arg0: i32, %arg1: i32) -> (i32, i32) {
    %c1_i32 = arith.constant 1 : i32
    %0 = arith.muli %arg0, %c1_i32 : i32
    %1 = arith.addi %0, %arg1 : i32
    %c0_i32 = arith.constant 0 : i32
    %2 = arith.minsi %1, %c0_i32 : i32
    %c0_i32_0 = arith.constant 0 : i32
    %c0_i32_1 = arith.constant 0 : i32
    return %2, %c0_i32_0 : i32, i32
  }
  func.func @transform_2(%arg0: i32, %arg1: i32) -> (i32, i32) {
    %c1_i32 = arith.constant 1 : i32
    %0 = arith.muli %arg0, %c1_i32 : i32
    %1 = arith.addi %0, %arg1 : i32
    %c0_i32 = arith.constant 0 : i32
    %2 = arith.minsi %1, %c0_i32 : i32
    %c0_i32_0 = arith.constant 0 : i32
    %c0_i32_1 = arith.constant 0 : i32
    return %2, %c0_i32_0 : i32, i32
  }
  func.func @transform_3(%arg0: i32, %arg1: i32) -> (i32, i32, i32) {
    %c0_i32 = arith.constant 0 : i32
    %c0_i32_0 = arith.constant 0 : i32
    %c0_i32_1 = arith.constant 0 : i32
    return %arg0, %c0_i32, %c0_i32_0 : i32, i32, i32
  }
}

</mosaic_0001>

<llo_original>
// kernel: tpu_custom_call.1
$region0: #{tpu_custom_call.1}
  #allocation0 [shape = 'u32[]', space=smem, size = 0x4, offset = 0x4, fixed_abs, tag = 'smem constant byte address 0x4 - core index']
  #allocation1 [shape = 'u32[72,128]{1,0:T(1,128)}', space=vmem, size = 0x9000, scoped, tag = 'internal scratch']
  #allocation2 [shape = 'f32[1,1]{1,0:T(1,128)}', space=vmem, size = 0x200, scoped, tag = 'scratch operand']
  %s0 = inlined_call_operand.vmem [shape: f32[8,32], index: 0, kind: input, shape index: {}]
  %s1 = inlined_call_operand.hbm [shape: f32[8,32], index: 1, kind: input, shape index: {}]
  %s2 = inlined_call_operand.vmem [shape: f32[8,1], index: 2, kind: input, shape index: {}]
  %s3 = inlined_call_operand.hbm [shape: f32[1,8,128], index: 3, kind: output, shape index: {}]
  %s4 = sld [smem:[#allocation0]]
  $region34: #{tpu_custom_call.1} parent=0
    _
  %s6 = ssub.s32 1, %s4
  %s7 = scalar_select 0, %s6, %s4
  $region1: #{tpu_custom_call.1} parent=0
    #allocation3 [shape = 'u8[4096]{0}', space=vmem, size = 0x1000, scoped, tag = 'input window, operand 1, single buffered']
    #allocation4 [shape = 's32[1]{0}', space=sflag, size = 0x4, scoped, tag = 'scoped memory for tpu_custom_call.1']
    #allocation5 [shape = 's32[1]{0}', space=sflag, size = 0x4, scoped, tag = 'scoped memory for tpu_custom_call.1']
    #allocation6 [shape = 'u8[4096]{0}', space=vmem, size = 0x1000, scoped, tag = 'output window, operand 0, single buffered']
    %8 = vsyncpa [#allocation4], 0
    %9 = vsyncpa [#allocation5], 0
    // Predicated region
    $region2: #{tpu_custom_call.1} parent=1 // pred_check
      _
    $region3: #{tpu_custom_call.1} parent=1 // pred_check_branch
      %11 = sbr.rel (0) target = $region5
    $region4: #{tpu_custom_call.1} parent=1 // pred_region
      %s12 = sadd.s32 0, 0
      %p13 = scmp.lt.s32.totalorder %s12, 0
      %s14 = scalar_select %p13, %s12, 0
      %p15 = scmp.lt.s32.totalorder %s14, 0
      %s16 = scalar_select %p15, %s14, 0
      %s17 = smul.addr %s16, 8
      %s18 = scalar_lea.vmem %s0, %s17
      %s19 = sadd.s32 0, 0
      %p20 = scmp.lt.s32.totalorder %s19, 0
      %s21 = scalar_select %p20, %s19, 0
    $region5: #{tpu_custom_call.1} parent=1 // pred_fallthru
      _
    // Predicated region
    $region6: #{tpu_custom_call.1} parent=1 // pred_check
      _
    $region7: #{tpu_custom_call.1} parent=1 // pred_check_branch
      %23 = sbr.rel (0) target = $region9
    $region8: #{tpu_custom_call.1} parent=1 // pred_region
      %s24 = sadd.s32 0, 0
      %p25 = scmp.lt.s32.totalorder %s24, 0
      %s26 = scalar_select %p25, %s24, 0
      %28 = vsyncadd [#allocation4], 0
      %s29 = smul.addr %s26, 8
      %s30 = scalar_lea.hbm %s1, %s29
      %s32 = sshll.u32 %s30, 4
      %s33 = int_to_ptr.hbm [resolvable:$true] %s32
      %s34 = sshll.u32 [#allocation3], 4
      %s35 = int_to_ptr.vmem [resolvable:$true] %s34
      %37 = dma.hbm_to_vmem [thread:$0]  %s33, 128, %s35, [#allocation4]
    $region9: #{tpu_custom_call.1} parent=1 // pred_fallthru
      _
    // Predicated region
    $region10: #{tpu_custom_call.1} parent=1 // pred_check
      _
    $region11: #{tpu_custom_call.1} parent=1 // pred_check_branch
      %39 = sbr.rel (0) target = $region13
    $region12: #{tpu_custom_call.1} parent=1 // pred_region
      %s40 = sadd.s32 0, 0
      %p41 = scmp.lt.s32.totalorder %s40, 0
      %s42 = scalar_select %p41, %s40, 0
      %p43 = scmp.lt.s32.totalorder %s42, 0
      %s44 = scalar_select %p43, %s42, 0
      %s45 = smul.addr %s44, 8
      %s46 = scalar_lea.vmem %s2, %s45
      %s47 = sadd.s32 0, 0
      %p48 = scmp.lt.s32.totalorder %s47, 0
      %s49 = scalar_select %p48, %s47, 0
    $region13: #{tpu_custom_call.1} parent=1 // pred_fallthru
      _
    // Predicated region
    $region14: #{tpu_custom_call.1} parent=1 // pred_check
      _
    $region15: #{tpu_custom_call.1} parent=1 // pred_check_branch
      %51 = sbr.rel (0) target = $region17
    $region16: #{tpu_custom_call.1} parent=1 // pred_region
      %53 = dma.done [#allocation4], 128
    $region17: #{tpu_custom_call.1} parent=1 // pred_fallthru
      _
    %s54 = sadd.s32 0, 0
    %p55 = scmp.lt.s32.totalorder %s54, 0
    %s56 = scalar_select %p55, %s54, 0
    %p57 = scmp.lt.s32.totalorder %s56, 0
    %s58 = scalar_select %p57, %s56, 0
    %s59 = smul.addr %s58, 8
    %s60 = scalar_lea.vmem %s0, %s59
    %s61 = sadd.s32 0, 0
    %p62 = scmp.lt.s32.totalorder %s61, 0
    %s63 = scalar_select %p62, %s61, 0
    %p64 = scmp.lt.s32.totalorder %s63, 0
    %s65 = scalar_select %p64, %s63, 0
    %s66 = smul.addr %s65, 8
    %s67 = scalar_lea.vmem %s2, %s66
    %s68 = sadd.s32 0, 0
    %p69 = scmp.lt.s32.totalorder %s68, 0
    %s70 = scalar_select %p69, %s68, 0
    %p71 = scmp.lt.s32.totalorder %s70, 0
    %s72 = scalar_select %p71, %s70, 0
    %s73 = smul.addr %s72, 8
    %s74 = scalar_lea.vmem %s0, %s73
    %s75 = sadd.s32 0, 0
    %p76 = scmp.lt.s32.totalorder %s75, 0
    %s77 = scalar_select %p76, %s75, 0
    %s78 = sadd.s32 0, 0
    %p79 = scmp.lt.s32.totalorder %s78, 0
    %s80 = scalar_select %p79, %s78, 0
    %s81 = sadd.s32 0, 0
    %p82 = scmp.lt.s32.totalorder %s81, 0
    %s83 = scalar_select %p82, %s81, 0
    %p84 = scmp.lt.s32.totalorder %s83, 0
    %s85 = scalar_select %p84, %s83, 0
    %s86 = smul.addr %s85, 8
    %s87 = scalar_lea.vmem %s2, %s86
    %s88 = sadd.s32 0, 0
    %p89 = scmp.lt.s32.totalorder %s88, 0
    %s90 = scalar_select %p89, %s88, 0
    %p91 = scmp.eq.s32.totalorder 0, 0
    // Predicated region
    $region18: #{tpu_custom_call.1} parent=1 // pred_check
      %p92 = pneg %p91
    $region19: #{tpu_custom_call.1} parent=1 // pred_check_branch
      %94 = sbr.rel (%p92) target = $region21
    $region20: #{tpu_custom_call.1} parent=1 // pred_region
      %vm95 = vcmask 0
      %96 = vst.msk [vmem:[#allocation2] sm:$0x1] %vm95, 0.0
    $region21: #{tpu_custom_call.1} parent=1 // pred_fallthru
      _
    %v97 = vld [vmem:[%s74] sm:$0xff]
    %v98 = vadd.f32 %v97, 1e-08
    %v99 = vld [vmem:[#allocation3] sm:$0xff]
    %v100 = vadd.f32 %v99, 1e-08
    %v101 = vmul.f32 %v98, %v98
    %vm102 = vcmask 261120
    %v103 = vsel %vm102, %v101, 0.0
    %104 = vadd.xlane.f32.xlu0 %v103
    %v105 = vpop.xlane.xlu0 %104
    %v106 = vmul.f32 %v100, %v100
    %v107 = vsel %vm102, %v106, 0.0
    %108 = vadd.xlane.f32.xlu0 %v107
    %v109 = vpop.xlane.xlu0 %108
    %v110 = vmul.f32 %v98, %v100
    %v111 = vsel %vm102, %v110, 0.0
    %112 = vadd.xlane.f32.xlu0 %v111
    %v113 = vpop.xlane.xlu0 %112
    %v114 = vmax.f32 %v105, 1e-24
    %v115 = vrsqrt.pop %v114
    %v116 = vmul.f32 %v115, %v114
    %v117 = vmul.f32 %v116, %v115
    %v118 = vmul.f32 0.5, %v117
    %v119 = vsub.f32 1.5, %v118
    %v120 = vmul.f32 %v115, %v119
    %vm121 = vweird.f32 %v114
    %vm122 = vweird.f32 %v115
    %vm123 = vmor %vm121, %vm122
    %v124 = vsel %vm123, %v115, %v120
    %v125 = vmax.f32 %v109, 1e-24
    %v126 = vrsqrt.pop %v125
    %v127 = vmul.f32 %v126, %v125
    %v128 = vmul.f32 %v127, %v126
    %v129 = vmul.f32 0.5, %v128
    %v130 = vsub.f32 1.5, %v129
    %v131 = vmul.f32 %v126, %v130
    %vm132 = vweird.f32 %v125
    %vm133 = vweird.f32 %v126
    %vm134 = vmor %vm132, %vm133
    %v135 = vsel %vm134, %v126, %v131
    %v136 = vmul.f32 %v113, %v124
    %v137 = vmul.f32 %v136, %v135
    %v138 = vadd.f32 %v137, 1.0
    %v139 = vmul.f32 %v138, 0.5
    %v140 = vmax.f32 %v139, 1e-06
    %v141 = vmin.f32 %v140, 0.999999
    %v142 = vld [vmem:[%s87] sm:$0xff]
    %v143 = vlog2.pop %v141
    %v144 = vmul.f32 %v143, 0.6931472
    %v145 = vmul.f32 %v142, %v144
    %v146 = vsub.f32 1.0, %v142
    %v147 = vsub.f32 1.0, %v141
    %v148 = vlog2.pop %v147
    %v149 = vmul.f32 %v148, 0.6931472
    %v150 = vmul.f32 %v146, %v149
    %v151 = vadd.f32 %v145, %v150
    %v152 = vsub.f32 0.0, %v151
    %s153 = sadd.s32 0, 0
    %s154 = smul.u32 %s153, 8
    %v155 = vlaneseq
    %v156 = vshrl.u32 %v155, 7
    %v157 = vstv %s154
    %v158 = vadd.s32 %v157, %v156
    %vm159 = vcmp.lt.s32.totalorder %v158, 8
    %v160 = vsel %vm159, %v152, 0.0
    %v161 = vld [vmem:[#allocation2] sm:$0x1]
    %vm162 = vcmask 7168
    %v163 = vsel %vm162, %v160, 0.0
    %v164 = vrot.slane %v163, 4
    %v165 = vadd.f32 %v163, %v164
    %v166 = vrot.slane %v165, 2
    %v167 = vadd.f32 %v165, %v166
    %v168 = vrot.slane %v167, 1
    %v169 = vadd.f32 %v167, %v168
    %v170 = vadd.f32 %v161, %v169
    %vm171 = vcmask 0
    %172 = vst.msk [vmem:[#allocation2] sm:$0x1] %vm171, %v170
    // Predicated region
    $region22: #{tpu_custom_call.1} parent=1 // pred_check
      %p173 = pneg %p91
    $region23: #{tpu_custom_call.1} parent=1 // pred_check_branch
      %175 = sbr.rel (%p173) target = $region25
    $region24: #{tpu_custom_call.1} parent=1 // pred_region
      %v176 = vld [vmem:[#allocation2] sm:$0x1]
      %v178 = vperm.slane %v176, 0
      %179 = vset.pattern.permute.xlu0 0
      %180 = vperm.xlu0 %179, %v178
      %v181 = vpop.permute.xlu0 %180
      %183 = vst [vmem:[#allocation6] sm:$0xff] %v181
    $region25: #{tpu_custom_call.1} parent=1 // pred_fallthru
      _
    // Predicated region
    $region26: #{tpu_custom_call.1} parent=1 // pred_check
      _
    $region27: #{tpu_custom_call.1} parent=1 // pred_check_branch
      %185 = sbr.rel (0) target = $region29
    $region28: #{tpu_custom_call.1} parent=1 // pred_region
      %187 = vsyncadd [#allocation5], 0
      %s189 = sshll.u32 [#allocation6], 4
      %s190 = int_to_ptr.vmem [resolvable:$true] %s189
      %s191 = sshll.u32 %s3, 4
      %s192 = int_to_ptr.hbm [resolvable:$true] %s191
      %194 = dma.vmem_to_hbm [thread:$0]  %s190, 128, %s192, [#allocation5]
    $region29: #{tpu_custom_call.1} parent=1 // pred_fallthru
      _
    // Predicated region
    $region30: #{tpu_custom_call.1} parent=1 // pred_check
      _
    $region31: #{tpu_custom_call.1} parent=1 // pred_check_branch
      %196 = sbr.rel (0) target = $region33
    $region32: #{tpu_custom_call.1} parent=1 // pred_region
      %198 = dma.done [#allocation5], 128
    $region33: #{tpu_custom_call.1} parent=1 // pred_fallthru
      _
    %199 = vsyncpa [#allocation4], 1
    %200 = vsyncpa [#allocation5], 1

</llo_original>
